<compile_context>
chip_gen: v7x
topology: tpu7x:2x2x1
jax: 0.10.0
libtpu: 0.0.40
codegen_flags: <defaults>
</compile_context>

<pallas_src>
import math

import jax
import jax.numpy as jnp
from jax import lax
from jax.experimental import pallas as pl
from jax.experimental.pallas import tpu as pltpu

_LOG10_OVER_400 = math.log(10.0) / 400.0

_LANE = 128
_SUB = 8


def _elo_kernel(ij_ref, r_ref, o_ref):
    """p = ln(10)/400 * (R[i] - R[j]) on a lane-dense batch tile.

    ij_ref: int32 [2, tb, 128] VMEM   (row 0 = model_a idx, row 1 = model_b idx)
    r_ref:  float32 [num_model] SMEM  (embedding table R.weight, flattened)
    o_ref:  float32 [tb, 128] VMEM
    """
    i = ij_ref[0]          # (tb, 128) int32
    j = ij_ref[1]          # (tb, 128) int32
    num_model = r_ref.shape[0]

    def body(m, acc):
        rm = r_ref[m]      # scalar f32 read from SMEM
        # Fused signed gather: + R[m] where i==m, - R[m] where j==m.
        return acc + jnp.where(i == m, rm, 0.0) - jnp.where(j == m, rm, 0.0)

    # Fully unroll small tables (LLO scheduler visibility); cap unroll for
    # large tables to bound code size.
    unroll = True if num_model <= 64 else 8
    diff = lax.fori_loop(0, num_model, body,
                         jnp.zeros(i.shape, jnp.float32), unroll=unroll)
    o_ref[...] = jnp.float32(_LOG10_OVER_400) * diff


def elo_forward(x, r_weight, *, max_tile_rows=256):
    """Pallas wrapper mirroring m_ELO.forward.

    x:        int [B, >=2]  (columns: model_a, model_b, [judge, ...])
    r_weight: float32 [num_model, 1]
    returns:  float32 [B, 1]
    """
    b = x.shape[0]
    num_model = r_weight.shape[0]

    # ---- lane-dense batch layout: pad B up to rows_pad * 128 ----
    rows = max(1, pl.cdiv(b, _LANE))
    rows = pl.cdiv(rows, _SUB) * _SUB                     # sublane-aligned
    tb = min(max_tile_rows, rows)
    tb = pl.cdiv(tb, _SUB) * _SUB                         # tile rows, multiple of 8
    rows_pad = pl.cdiv(rows, tb) * tb
    b_pad = rows_pad * _LANE

    # Single index tile: [2, rows_pad, 128]; padded slots index model 0
    # (they compute R[0]-R[0]=0 and are sliced off).  Built via stack+pad
    # (cheaper than zeros + dynamic-update-slice scatters).
    ij = jnp.stack([x[:, 0], x[:, 1]], axis=0).astype(jnp.int32)   # (2, B)
    ij = jnp.pad(ij, ((0, 0), (0, b_pad - b)))                      # (2, b_pad)
    ij = ij.reshape(2, rows_pad, _LANE)

    # R table flattened for SMEM residence (scalar reads in the kernel).
    r_flat = r_weight.reshape(num_model).astype(jnp.float32)

    out = pl.pallas_call(
        _elo_kernel,
        out_shape=jax.ShapeDtypeStruct((rows_pad, _LANE), jnp.float32),
        grid=(rows_pad // tb,),
        in_specs=[
            pl.BlockSpec((2, tb, _LANE), lambda g: (0, g, 0)),
            pl.BlockSpec(memory_space=pltpu.MemorySpace.SMEM),   # whole R table, resident
        ],
        out_specs=pl.BlockSpec((tb, _LANE), lambda g: (g, 0)),
        compiler_params=pltpu.CompilerParams(
            dimension_semantics=("parallel",)),
    )(ij, r_flat)

    return out.reshape(b_pad)[:b].reshape(b, 1)


def xavier_uniform(key, shape):
    """torch.nn.init.xavier_uniform_ for a 2-D weight: U(-a, a), a = sqrt(6/(fan_in+fan_out))."""
    fan_out, fan_in = shape  # nn.Embedding weight is (num_embeddings, embedding_dim)
    a = math.sqrt(6.0 / (fan_in + fan_out))
    return jax.random.uniform(key, shape, dtype=jnp.float32, minval=-a, maxval=a)


if __name__ == "__main__":
    key = jax.random.PRNGKey(0)
    k_r, k_theta, k_x = jax.random.split(key, 3)

    num_model = 8
    num_judge = 4
    batch = 8

    # Deterministic parameter init (shapes from __init__): R: (num_model, 1), Theta: (num_judge, 1)
    r_weight = xavier_uniform(k_r, (num_model, 1))
    theta_weight = xavier_uniform(k_theta, (num_judge, 1))  # unused in forward (kept for fidelity)

    # x: [B, 3] integer indices (model_a, model_b, judge); forward uses cols 0 and 1.
    model_pairs = jax.random.randint(k_x, (batch, 2), 0, num_model, dtype=jnp.int32)
    judges = jax.random.randint(jax.random.fold_in(k_x, 1), (batch, 1), 0, num_judge, dtype=jnp.int32)
    x = jnp.concatenate([model_pairs, judges], axis=1)

    p = elo_forward(x, r_weight)
    jax.block_until_ready(p)

    # Reference check in plain JAX (same math as the PyTorch forward).
    r_i = r_weight[x[:, 0]]
    r_j = r_weight[x[:, 1]]
    p_ref = (math.log(10.0) / 400.0) * (r_i - r_j)
    assert p.shape == (batch, 1)
    assert jnp.allclose(p, p_ref, atol=1e-6), (p, p_ref)

    print("KERNEL_OK")
</pallas_src>

<mosaic_0001>
module attributes {stable_mosaic.version = 11 : i64} {
  func.func @_elo_kernel(%arg0: i32, %arg1: memref<2x8x128xi32, #tpu.memory_space<vmem>>, %arg2: memref<8xf32, #tpu.memory_space<smem>>, %arg3: memref<8x128xf32, #tpu.memory_space<vmem>>) attributes {dimension_semantics = [#tpu.dimension_semantics<parallel>], iteration_bounds = array<i64: 1>, scalar_prefetch = 0 : i64, scratch_operands = 0 : i64, tpu.core_type = #tpu.core_type<tc>, window_params = [{transform_indices = @transform_0, window_bounds = array<i64: 2, 8, 128>}, {transform_indices = @transform_1, window_bounds = array<i64: 8>}, {transform_indices = @transform_2, window_bounds = array<i64: 8, 128>}]} {
    %c0 = arith.constant 0 : index
    %c0_0 = arith.constant 0 : index
    %c0_1 = arith.constant 0 : index
    %0 = vector.load %arg1[%c0, %c0_0, %c0_1] : memref<2x8x128xi32, #tpu.memory_space<vmem>>, vector<1x8x128xi32>
    %1 = vector.shape_cast %0 : vector<1x8x128xi32> to vector<8x128xi32>
    %c1 = arith.constant 1 : index
    %c0_2 = arith.constant 0 : index
    %c0_3 = arith.constant 0 : index
    %2 = vector.load %arg1[%c1, %c0_2, %c0_3] : memref<2x8x128xi32, #tpu.memory_space<vmem>>, vector<1x8x128xi32>
    %3 = vector.shape_cast %2 : vector<1x8x128xi32> to vector<8x128xi32>
    %cst = arith.constant 0.000000e+00 : f32
    %4 = vector.broadcast %cst : f32 to vector<8x128xf32>
    %c0_i32 = arith.constant 0 : i32
    %5 = arith.index_cast %c0_i32 : i32 to index
    %6 = memref.load %arg2[%5] : memref<8xf32, #tpu.memory_space<smem>>
    %7 = vector.broadcast %c0_i32 : i32 to vector<8x128xi32>
    %8 = arith.cmpi eq, %1, %7 : vector<8x128xi32>
    %cst_4 = arith.constant 0.000000e+00 : f32
    %9 = vector.broadcast %6 : f32 to vector<8x128xf32>
    %10 = vector.broadcast %cst_4 : f32 to vector<8x128xf32>
    %11 = arith.select %8, %9, %10 : vector<8x128xi1>, vector<8x128xf32>
    %12 = arith.addf %4, %11 : vector<8x128xf32>
    %13 = vector.broadcast %c0_i32 : i32 to vector<8x128xi32>
    %14 = arith.cmpi eq, %3, %13 : vector<8x128xi32>
    %cst_5 = arith.constant 0.000000e+00 : f32
    %15 = vector.broadcast %6 : f32 to vector<8x128xf32>
    %16 = vector.broadcast %cst_5 : f32 to vector<8x128xf32>
    %17 = arith.select %14, %15, %16 : vector<8x128xi1>, vector<8x128xf32>
    %18 = arith.subf %12, %17 : vector<8x128xf32>
    %c1_i32 = arith.constant 1 : i32
    %19 = arith.index_cast %c1_i32 : i32 to index
    %20 = memref.load %arg2[%19] : memref<8xf32, #tpu.memory_space<smem>>
    %21 = vector.broadcast %c1_i32 : i32 to vector<8x128xi32>
    %22 = arith.cmpi eq, %1, %21 : vector<8x128xi32>
    %cst_6 = arith.constant 0.000000e+00 : f32
    %23 = vector.broadcast %20 : f32 to vector<8x128xf32>
    %24 = vector.broadcast %cst_6 : f32 to vector<8x128xf32>
    %25 = arith.select %22, %23, %24 : vector<8x128xi1>, vector<8x128xf32>
    %26 = arith.addf %18, %25 : vector<8x128xf32>
    %27 = vector.broadcast %c1_i32 : i32 to vector<8x128xi32>
    %28 = arith.cmpi eq, %3, %27 : vector<8x128xi32>
    %cst_7 = arith.constant 0.000000e+00 : f32
    %29 = vector.broadcast %20 : f32 to vector<8x128xf32>
    %30 = vector.broadcast %cst_7 : f32 to vector<8x128xf32>
    %31 = arith.select %28, %29, %30 : vector<8x128xi1>, vector<8x128xf32>
    %32 = arith.subf %26, %31 : vector<8x128xf32>
    %c2_i32 = arith.constant 2 : i32
    %33 = arith.index_cast %c2_i32 : i32 to index
    %34 = memref.load %arg2[%33] : memref<8xf32, #tpu.memory_space<smem>>
    %35 = vector.broadcast %c2_i32 : i32 to vector<8x128xi32>
    %36 = arith.cmpi eq, %1, %35 : vector<8x128xi32>
    %cst_8 = arith.constant 0.000000e+00 : f32
    %37 = vector.broadcast %34 : f32 to vector<8x128xf32>
    %38 = vector.broadcast %cst_8 : f32 to vector<8x128xf32>
    %39 = arith.select %36, %37, %38 : vector<8x128xi1>, vector<8x128xf32>
    %40 = arith.addf %32, %39 : vector<8x128xf32>
    %41 = vector.broadcast %c2_i32 : i32 to vector<8x128xi32>
    %42 = arith.cmpi eq, %3, %41 : vector<8x128xi32>
    %cst_9 = arith.constant 0.000000e+00 : f32
    %43 = vector.broadcast %34 : f32 to vector<8x128xf32>
    %44 = vector.broadcast %cst_9 : f32 to vector<8x128xf32>
    %45 = arith.select %42, %43, %44 : vector<8x128xi1>, vector<8x128xf32>
    %46 = arith.subf %40, %45 : vector<8x128xf32>
    %c3_i32 = arith.constant 3 : i32
    %47 = arith.index_cast %c3_i32 : i32 to index
    %48 = memref.load %arg2[%47] : memref<8xf32, #tpu.memory_space<smem>>
    %49 = vector.broadcast %c3_i32 : i32 to vector<8x128xi32>
    %50 = arith.cmpi eq, %1, %49 : vector<8x128xi32>
    %cst_10 = arith.constant 0.000000e+00 : f32
    %51 = vector.broadcast %48 : f32 to vector<8x128xf32>
    %52 = vector.broadcast %cst_10 : f32 to vector<8x128xf32>
    %53 = arith.select %50, %51, %52 : vector<8x128xi1>, vector<8x128xf32>
    %54 = arith.addf %46, %53 : vector<8x128xf32>
    %55 = vector.broadcast %c3_i32 : i32 to vector<8x128xi32>
    %56 = arith.cmpi eq, %3, %55 : vector<8x128xi32>
    %cst_11 = arith.constant 0.000000e+00 : f32
    %57 = vector.broadcast %48 : f32 to vector<8x128xf32>
    %58 = vector.broadcast %cst_11 : f32 to vector<8x128xf32>
    %59 = arith.select %56, %57, %58 : vector<8x128xi1>, vector<8x128xf32>
    %60 = arith.subf %54, %59 : vector<8x128xf32>
    %c4_i32 = arith.constant 4 : i32
    %61 = arith.index_cast %c4_i32 : i32 to index
    %62 = memref.load %arg2[%61] : memref<8xf32, #tpu.memory_space<smem>>
    %63 = vector.broadcast %c4_i32 : i32 to vector<8x128xi32>
    %64 = arith.cmpi eq, %1, %63 : vector<8x128xi32>
    %cst_12 = arith.constant 0.000000e+00 : f32
    %65 = vector.broadcast %62 : f32 to vector<8x128xf32>
    %66 = vector.broadcast %cst_12 : f32 to vector<8x128xf32>
    %67 = arith.select %64, %65, %66 : vector<8x128xi1>, vector<8x128xf32>
    %68 = arith.addf %60, %67 : vector<8x128xf32>
    %69 = vector.broadcast %c4_i32 : i32 to vector<8x128xi32>
    %70 = arith.cmpi eq, %3, %69 : vector<8x128xi32>
    %cst_13 = arith.constant 0.000000e+00 : f32
    %71 = vector.broadcast %62 : f32 to vector<8x128xf32>
    %72 = vector.broadcast %cst_13 : f32 to vector<8x128xf32>
    %73 = arith.select %70, %71, %72 : vector<8x128xi1>, vector<8x128xf32>
    %74 = arith.subf %68, %73 : vector<8x128xf32>
    %c5_i32 = arith.constant 5 : i32
    %75 = arith.index_cast %c5_i32 : i32 to index
    %76 = memref.load %arg2[%75] : memref<8xf32, #tpu.memory_space<smem>>
    %77 = vector.broadcast %c5_i32 : i32 to vector<8x128xi32>
    %78 = arith.cmpi eq, %1, %77 : vector<8x128xi32>
    %cst_14 = arith.constant 0.000000e+00 : f32
    %79 = vector.broadcast %76 : f32 to vector<8x128xf32>
    %80 = vector.broadcast %cst_14 : f32 to vector<8x128xf32>
    %81 = arith.select %78, %79, %80 : vector<8x128xi1>, vector<8x128xf32>
    %82 = arith.addf %74, %81 : vector<8x128xf32>
    %83 = vector.broadcast %c5_i32 : i32 to vector<8x128xi32>
    %84 = arith.cmpi eq, %3, %83 : vector<8x128xi32>
    %cst_15 = arith.constant 0.000000e+00 : f32
    %85 = vector.broadcast %76 : f32 to vector<8x128xf32>
    %86 = vector.broadcast %cst_15 : f32 to vector<8x128xf32>
    %87 = arith.select %84, %85, %86 : vector<8x128xi1>, vector<8x128xf32>
    %88 = arith.subf %82, %87 : vector<8x128xf32>
    %c6_i32 = arith.constant 6 : i32
    %89 = arith.index_cast %c6_i32 : i32 to index
    %90 = memref.load %arg2[%89] : memref<8xf32, #tpu.memory_space<smem>>
    %91 = vector.broadcast %c6_i32 : i32 to vector<8x128xi32>
    %92 = arith.cmpi eq, %1, %91 : vector<8x128xi32>
    %cst_16 = arith.constant 0.000000e+00 : f32
    %93 = vector.broadcast %90 : f32 to vector<8x128xf32>
    %94 = vector.broadcast %cst_16 : f32 to vector<8x128xf32>
    %95 = arith.select %92, %93, %94 : vector<8x128xi1>, vector<8x128xf32>
    %96 = arith.addf %88, %95 : vector<8x128xf32>
    %97 = vector.broadcast %c6_i32 : i32 to vector<8x128xi32>
    %98 = arith.cmpi eq, %3, %97 : vector<8x128xi32>
    %cst_17 = arith.constant 0.000000e+00 : f32
    %99 = vector.broadcast %90 : f32 to vector<8x128xf32>
    %100 = vector.broadcast %cst_17 : f32 to vector<8x128xf32>
    %101 = arith.select %98, %99, %100 : vector<8x128xi1>, vector<8x128xf32>
    %102 = arith.subf %96, %101 : vector<8x128xf32>
    %c7_i32 = arith.constant 7 : i32
    %103 = arith.index_cast %c7_i32 : i32 to index
    %104 = memref.load %arg2[%103] : memref<8xf32, #tpu.memory_space<smem>>
    %105 = vector.broadcast %c7_i32 : i32 to vector<8x128xi32>
    %106 = arith.cmpi eq, %1, %105 : vector<8x128xi32>
    %cst_18 = arith.constant 0.000000e+00 : f32
    %107 = vector.broadcast %104 : f32 to vector<8x128xf32>
    %108 = vector.broadcast %cst_18 : f32 to vector<8x128xf32>
    %109 = arith.select %106, %107, %108 : vector<8x128xi1>, vector<8x128xf32>
    %110 = arith.addf %102, %109 : vector<8x128xf32>
    %111 = vector.broadcast %c7_i32 : i32 to vector<8x128xi32>
    %112 = arith.cmpi eq, %3, %111 : vector<8x128xi32>
    %cst_19 = arith.constant 0.000000e+00 : f32
    %113 = vector.broadcast %104 : f32 to vector<8x128xf32>
    %114 = vector.broadcast %cst_19 : f32 to vector<8x128xf32>
    %115 = arith.select %112, %113, %114 : vector<8x128xi1>, vector<8x128xf32>
    %116 = arith.subf %110, %115 : vector<8x128xf32>
    %c8_i32 = arith.constant 8 : i32
    %cst_20 = arith.constant 0.00575646292 : f32
    %117 = vector.broadcast %cst_20 : f32 to vector<8x128xf32>
    %118 = arith.mulf %117, %116 : vector<8x128xf32>
    %c0_21 = arith.constant 0 : index
    %c0_22 = arith.constant 0 : index
    %119 = vector.load %arg3[%c0_21, %c0_22] : memref<8x128xf32, #tpu.memory_space<vmem>>, vector<8x128xf32>
    tpu.vector_store %arg3[%c0_21, %c0_22], %118 {strides = array<i32>} : memref<8x128xf32, #tpu.memory_space<vmem>>, vector<8x128xf32>,
    return
  }
  func.func @transform_0(%arg0: i32) -> (i32, i32, i32) {
    %c0_i32 = arith.constant 0 : i32
    %c0_i32_0 = arith.constant 0 : i32
    %c0_i32_1 = arith.constant 0 : i32
    return %c0_i32, %arg0, %c0_i32_0 : i32, i32, i32
  }
  func.func @transform_1(%arg0: i32) -> i32 {
    %c0_i32 = arith.constant 0 : i32
    %c0_i32_0 = arith.constant 0 : i32
    return %c0_i32 : i32
  }
  func.func @transform_2(%arg0: i32) -> (i32, i32) {
    %c0_i32 = arith.constant 0 : i32
    %c0_i32_0 = arith.constant 0 : i32
    return %arg0, %c0_i32 : i32, i32
  }
}

</mosaic_0001>

<llo_original>
// kernel: tpu_custom_call.1
$region0: #{tpu_custom_call.1}
  #allocation0 [shape = 'u32[]', space=smem, size = 0x4, offset = 0x4, fixed_abs, tag = 'smem constant byte address 0x4 - core index']
  #allocation1 [shape = 'u32[144,128]{1,0:T(1,128)}', space=vmem, size = 0x12000, scoped, tag = 'internal scratch']
  %s0 = inlined_call_operand.hbm [shape: s32[2,8,128], index: 0, kind: input, shape index: {}]
  %s1 = inlined_call_operand.vmem [shape: f32[8], index: 1, kind: input, shape index: {}]
  %s2 = inlined_call_operand.hbm [shape: f32[8,128], index: 2, kind: output, shape index: {}]
  %s3 = sld [smem:[#allocation0]]
  $region26: #{tpu_custom_call.1} parent=0
    _
  %s5 = ssub.s32 1, %s3
  %s6 = scalar_select 0, %s5, %s3
  $region1: #{tpu_custom_call.1} parent=0
    #allocation2 [shape = 'u8[8192]{0}', space=vmem, size = 0x2000, scoped, tag = 'input window, operand 0, single buffered']
    #allocation3 [shape = 's32[1]{0}', space=sflag, size = 0x4, scoped, tag = 'scoped memory for tpu_custom_call.1']
    #allocation4 [shape = 's32[1]{0}', space=sflag, size = 0x4, scoped, tag = 'scoped memory for tpu_custom_call.1']
    #allocation5 [shape = 's32[1]{0}', space=sflag, size = 0x4, scoped, tag = 'scoped memory for tpu_custom_call.1']
    #allocation6 [shape = 'u8[512]{0}', space=smem, size = 0x200, scoped, tag = 'input window, operand 1, single buffered']
    #allocation7 [shape = 'u8[4096]{0}', space=vmem, size = 0x1000, scoped, tag = 'output window, operand 0, single buffered']
    %7 = vsyncpa [#allocation3], 0
    %8 = vsyncpa [#allocation5], 0
    %9 = vsyncpa [#allocation4], 0
    // Predicated region
    $region2: #{tpu_custom_call.1} parent=1 // pred_check
      _
    $region3: #{tpu_custom_call.1} parent=1 // pred_check_branch
      %11 = sbr.rel (0) target = $region5
    $region4: #{tpu_custom_call.1} parent=1 // pred_region
      %s13 = ssub.s32 256, 256
      %14 = vsyncadd [#allocation3], %s13
      %s15 = sshll.u32 [#allocation2], 4
      %s16 = int_to_ptr.vmem [resolvable:$true] %s15
      %21 = dma.hbm_to_vmem [thread:$0]  %s0, 256, %s16, [#allocation3], 128, 128, 8
    $region5: #{tpu_custom_call.1} parent=1 // pred_fallthru
      _
    // Predicated region
    $region6: #{tpu_custom_call.1} parent=1 // pred_check
      _
    $region7: #{tpu_custom_call.1} parent=1 // pred_check_branch
      %23 = sbr.rel (0) target = $region9
    $region8: #{tpu_custom_call.1} parent=1 // pred_region
      %s25 = ssub.s32 16, 16
      %26 = vsyncadd [#allocation5], %s25
      %s28 = sshll.u32 %s1, 4
      %s29 = int_to_ptr.vmem [resolvable:$true] %s28
      %31 = dma.vmem_to_smem %s29, 16, [#allocation6], [#allocation5]
    $region9: #{tpu_custom_call.1} parent=1 // pred_fallthru
      _
    // Predicated region
    $region10: #{tpu_custom_call.1} parent=1 // pred_check
      _
    $region11: #{tpu_custom_call.1} parent=1 // pred_check_branch
      %33 = sbr.rel (0) target = $region13
    $region12: #{tpu_custom_call.1} parent=1 // pred_region
      %34 = dma.done [#allocation3], 256
    $region13: #{tpu_custom_call.1} parent=1 // pred_fallthru
      _
    // Predicated region
    $region14: #{tpu_custom_call.1} parent=1 // pred_check
      _
    $region15: #{tpu_custom_call.1} parent=1 // pred_check_branch
      %36 = sbr.rel (0) target = $region17
    $region16: #{tpu_custom_call.1} parent=1 // pred_region
      %37 = dma.done [#allocation5], 16
    $region17: #{tpu_custom_call.1} parent=1 // pred_fallthru
      _
    %38 = sfence
    %v39 = vld [vmem:[#allocation2] sm:$0xff]
    %s40 = scalar_lea.vmem [#allocation2], 8
    %v41 = vld [vmem:[%s40] sm:$0xff]
    %s42 = sld [smem:[#allocation6]]
    %vm43 = vcmp.eq.s32.totalorder %v39, 0
    %v44 = vstv %s42
    %v45 = vsel %vm43, %v44, 0.0
    %v46 = vadd.f32 %v45, 0.0
    %vm47 = vcmp.eq.s32.totalorder %v41, 0
    %v48 = vsel %vm47, %v44, 0.0
    %v49 = vsub.f32 %v46, %v48
    %s50 = sld [smem:[#allocation6 + $0x1]]
    %vm51 = vcmp.eq.s32.totalorder %v39, 1
    %v52 = vstv %s50
    %v53 = vsel %vm51, %v52, 0.0
    %v54 = vadd.f32 %v49, %v53
    %vm55 = vcmp.eq.s32.totalorder %v41, 1
    %v56 = vsel %vm55, %v52, 0.0
    %v57 = vsub.f32 %v54, %v56
    %s58 = sld [smem:[#allocation6 + $0x2]]
    %vm59 = vcmp.eq.s32.totalorder %v39, 2
    %v60 = vstv %s58
    %v61 = vsel %vm59, %v60, 0.0
    %v62 = vadd.f32 %v57, %v61
    %vm63 = vcmp.eq.s32.totalorder %v41, 2
    %v64 = vsel %vm63, %v60, 0.0
    %v65 = vsub.f32 %v62, %v64
    %s66 = sld [smem:[#allocation6 + $0x3]]
    %vm67 = vcmp.eq.s32.totalorder %v39, 3
    %v68 = vstv %s66
    %v69 = vsel %vm67, %v68, 0.0
    %v70 = vadd.f32 %v65, %v69
    %vm71 = vcmp.eq.s32.totalorder %v41, 3
    %v72 = vsel %vm71, %v68, 0.0
    %v73 = vsub.f32 %v70, %v72
    %s74 = sld [smem:[#allocation6 + $0x4]]
    %vm75 = vcmp.eq.s32.totalorder %v39, 4
    %v76 = vstv %s74
    %v77 = vsel %vm75, %v76, 0.0
    %v78 = vadd.f32 %v73, %v77
    %vm79 = vcmp.eq.s32.totalorder %v41, 4
    %v80 = vsel %vm79, %v76, 0.0
    %v81 = vsub.f32 %v78, %v80
    %s82 = sld [smem:[#allocation6 + $0x5]]
    %vm83 = vcmp.eq.s32.totalorder %v39, 5
    %v84 = vstv %s82
    %v85 = vsel %vm83, %v84, 0.0
    %v86 = vadd.f32 %v81, %v85
    %vm87 = vcmp.eq.s32.totalorder %v41, 5
    %v88 = vsel %vm87, %v84, 0.0
    %v89 = vsub.f32 %v86, %v88
    %s90 = sld [smem:[#allocation6 + $0x6]]
    %vm91 = vcmp.eq.s32.totalorder %v39, 6
    %v92 = vstv %s90
    %v93 = vsel %vm91, %v92, 0.0
    %v94 = vadd.f32 %v89, %v93
    %vm95 = vcmp.eq.s32.totalorder %v41, 6
    %v96 = vsel %vm95, %v92, 0.0
    %v97 = vsub.f32 %v94, %v96
    %s98 = sld [smem:[#allocation6 + $0x7]]
    %vm99 = vcmp.eq.s32.totalorder %v39, 7
    %v100 = vstv %s98
    %v101 = vsel %vm99, %v100, 0.0
    %v102 = vadd.f32 %v97, %v101
    %vm103 = vcmp.eq.s32.totalorder %v41, 7
    %v104 = vsel %vm103, %v100, 0.0
    %v105 = vsub.f32 %v102, %v104
    %v106 = vmul.f32 %v105, 0.005756463
    %107 = vst [vmem:[#allocation7] sm:$0xff] %v106
    // Predicated region
    $region18: #{tpu_custom_call.1} parent=1 // pred_check
      _
    $region19: #{tpu_custom_call.1} parent=1 // pred_check_branch
      %109 = sbr.rel (0) target = $region21
    $region20: #{tpu_custom_call.1} parent=1 // pred_region
      %s111 = ssub.s32 128, 128
      %112 = vsyncadd [#allocation4], %s111
      %s114 = sshll.u32 [#allocation7], 4
      %s115 = int_to_ptr.vmem [resolvable:$true] %s114
      %117 = dma.vmem_to_hbm [thread:$0]  %s115, 128, %s2, [#allocation4]
    $region21: #{tpu_custom_call.1} parent=1 // pred_fallthru
      _
    // Predicated region
    $region22: #{tpu_custom_call.1} parent=1 // pred_check
      _
    $region23: #{tpu_custom_call.1} parent=1 // pred_check_branch
      %119 = sbr.rel (0) target = $region25
    $region24: #{tpu_custom_call.1} parent=1 // pred_region
      %120 = dma.done [#allocation4], 128
    $region25: #{tpu_custom_call.1} parent=1 // pred_fallthru
      _
    %121 = vsyncpa [#allocation3], 1
    %122 = vsyncpa [#allocation4], 1
    %123 = vsyncpa [#allocation5], 1

</llo_original>
